<compile_context>
chip_gen: v6e
topology: v6e:2x2x1
jax: 0.10.0
libtpu: 0.0.40
codegen_flags: <defaults>
</compile_context>

<pallas_src>
import math
import jax
import jax.numpy as jnp
from jax.experimental import pallas as pl
from jax.experimental.pallas import tpu as pltpu


# ---------------------------------------------------------------------------
# Static layout constants (default FCNet config: all feature widths <= 15).
# ---------------------------------------------------------------------------
IN_PAD = 16     # padded contraction width (all fan-ins / hidden widths <= 16)
N_PAD = 128     # padded output-lane width of every weight slab


def _round_up(n, m):
    return ((n + m - 1) // m) * m


# ---------------------------------------------------------------------------
# Kernel: whole MLP forward for one (TB, infeats) batch tile.
#   x_ref:    (TB, infeats)        f32   raw (unpadded) input rows
#   w_ref:    (L, IN_PAD, N_PAD)   bf16  zero-padded weights (VMEM resident)
#   b_ref:    (L, 1, N_PAD)        f32   zero-padded biases  (VMEM resident)
#   o_ref:    (TB, outfeats)       f32
#   xpad_ref: (TB, IN_PAD)         bf16  scratch used to widen x to 16 lanes
#
# Invariant: weight rows >= fan_in and columns >= fan_out are exactly zero,
# biases are zero beyond fan_out, and every true feature width is <= IN_PAD,
# so carrying activations as (TB, IN_PAD) and contracting over the padded 16
# lanes is mathematically identical to the unpadded network.
# ---------------------------------------------------------------------------
def fcnet_kernel(x_ref, w_ref, b_ref, o_ref, xpad_ref):
    nlayers = w_ref.shape[0]
    infeats = x_ref.shape[1]

    # Widen x (TB, infeats) -> (TB, IN_PAD) bf16 via VMEM scratch.  Re-zeroed
    # every grid step so the pad columns are exact zeros regardless of
    # megacore grid sharding or ragged boundary blocks.
    xpad_ref[...] = jnp.zeros_like(xpad_ref)
    xpad_ref[:, :infeats] = x_ref[...].astype(jnp.bfloat16)
    h = xpad_ref[...]                                         # (TB, IN_PAD) bf16

    out = None
    for l in range(nlayers):                                  # statically unrolled
        w = w_ref[l]                                          # (IN_PAD, N_PAD) bf16
        z = jnp.dot(h, w, preferred_element_type=jnp.float32)  # (TB, N_PAD) f32
        z = z + b_ref[l]                                      # f32 bias add
        if l < nlayers - 1:
            # ReLU in f32, then narrow back to the 16 nonzero columns for the
            # next contraction (zero-column invariant) and cast for the MXU.
            h = jnp.maximum(z, 0.0)[:, :IN_PAD].astype(jnp.bfloat16)
        else:
            out = z                                           # lastivation=None

    # Lane-sparse store of the true output columns only.
    o_ref[...] = out[:, : o_ref.shape[1]].astype(o_ref.dtype)


# ---------------------------------------------------------------------------
# Parameter packing: all (W, b) pairs fused into one bf16 weight slab plus a
# tiny f32 bias slab, zero-padded.
# ---------------------------------------------------------------------------
def pack_params(params):
    nlayers = len(params)
    w_pack = jnp.zeros((nlayers, IN_PAD, N_PAD), jnp.float32)
    b_pack = jnp.zeros((nlayers, 1, N_PAD), jnp.float32)
    for li, (w, b) in enumerate(params):
        fan_in, fan_out = w.shape
        assert fan_in <= IN_PAD, "contraction width must fit the 16-lane pad"
        assert fan_out <= N_PAD
        if li + 1 < nlayers:
            # Next layer contracts only over the first IN_PAD activation
            # columns, so every non-final fan_out must also fit there.
            assert fan_out <= IN_PAD
        w_pack = w_pack.at[li, :fan_in, :fan_out].set(w.astype(jnp.float32))
        b_pack = b_pack.at[li, 0, :fan_out].set(
            jnp.reshape(b, (-1,)).astype(jnp.float32))
    return w_pack.astype(jnp.bfloat16), b_pack


# ---------------------------------------------------------------------------
# Batch-tile selection: multiple of 8, <= tile_b, and (when B > 8) at least
# two grid blocks so v7x megacore can shard the batch across both TensorCores.
# ---------------------------------------------------------------------------
def _choose_tile_b(B, tile_b):
    if B <= 8:
        return B                          # single block == full array dim (legal)
    tb = min(_round_up(tile_b, 8), _round_up(B, 8))
    while tb > 8 and pl.cdiv(B, tb) < 2:
        tb = _round_up(max(8, tb // 2), 8)
    return tb


# ---------------------------------------------------------------------------
# Wrapper: batch-tiled pallas_call (no wrapper-side pad or slice-back passes).
# ---------------------------------------------------------------------------
def fcnet_forward(x, params, tile_b=4096):
    """FCNet forward pass.

    x:      (B, infeats) float32
    params: list of (W, b) with W: (fan_in, fan_out), b: (1, fan_out)
    tile_b: batch-tile upper bound (sweep 2048/4096/8192 per chip generation).
    """
    if x.dtype != jnp.float32:
        x = x.astype(jnp.float32)
    B, infeats = x.shape
    assert infeats <= IN_PAD
    outfeats = params[-1][0].shape[1]
    nlayers = len(params)

    w_pack, b_pack = pack_params(params)      # (L,16,128) bf16, (L,1,128) f32

    TB = _choose_tile_b(B, tile_b)
    grid = (pl.cdiv(B, TB),)                  # ragged last block handled by Pallas

    return pl.pallas_call(
        fcnet_kernel,
        grid=grid,
        in_specs=[
            # Streamed / double-buffered batch tile of raw inputs; minor dim
            # equals the full array dim (10) so no lane-padding HBM pass.
            pl.BlockSpec((TB, infeats), lambda i: (i, 0)),
            # Fused parameter slabs: constant index_map -> VMEM resident.
            pl.BlockSpec((nlayers, IN_PAD, N_PAD), lambda i: (0, 0, 0)),
            pl.BlockSpec((nlayers, 1, N_PAD), lambda i: (0, 0, 0)),
        ],
        out_specs=pl.BlockSpec((TB, outfeats), lambda i: (i, 0)),
        out_shape=jax.ShapeDtypeStruct((B, outfeats), jnp.float32),
        scratch_shapes=[pltpu.VMEM((TB, IN_PAD), jnp.bfloat16)],
        compiler_params=pltpu.CompilerParams(
            dimension_semantics=("parallel",),       # v7x: both TensorCores
            vmem_limit_bytes=40 * 1024 * 1024),      # > v5e 16 MiB default, < v7x HW
    )(x, w_pack, b_pack)


# ---------------------------------------------------------------------------
# Deterministic init (mimics nn.Linear default Kaiming-uniform bounds).
# ---------------------------------------------------------------------------
def init_fcnet_params(key, infeats=10, outfeats=10, layers=(15, 10, 15)):
    dims = [infeats] + list(layers) + [outfeats]
    params = []
    for i in range(len(dims) - 1):
        fan_in, fan_out = dims[i], dims[i + 1]
        key, kw, kb = jax.random.split(key, 3)
        bound = 1.0 / math.sqrt(fan_in)
        w = jax.random.uniform(kw, (fan_in, fan_out), jnp.float32, -bound, bound)
        b = jax.random.uniform(kb, (1, fan_out), jnp.float32, -bound, bound)
        params.append((w, b))
    return params


# ---------------------------------------------------------------------------
# References.
# ---------------------------------------------------------------------------
def fcnet_reference_f32(x, params):
    """Pure-f32 reference (matches the PyTorch module's math)."""
    h = x
    for i, (w, b) in enumerate(params):
        h = h @ w + b
        if i < len(params) - 1:
            h = jnp.maximum(h, 0.0)
    return h


def fcnet_reference_bf16(x, params):
    """Reference that mimics the kernel's numerics exactly:
    bf16 matmul operands, f32 accumulation, f32 bias/ReLU."""
    h = x.astype(jnp.float32)
    for i, (w, b) in enumerate(params):
        h = jnp.dot(h.astype(jnp.bfloat16), w.astype(jnp.bfloat16),
                    preferred_element_type=jnp.float32) + b
        if i < len(params) - 1:
            h = jnp.maximum(h, 0.0)
    return h


if __name__ == "__main__":
    key = jax.random.PRNGKey(0)
    key, kx = jax.random.split(key)

    infeats, outfeats, hidden = 10, 10, (15, 10, 15)
    params = init_fcnet_params(key, infeats=infeats, outfeats=outfeats,
                               layers=hidden)

    # 1) Small batch: single full-dim block.
    B_small = 8
    x_small = jax.random.normal(kx, (B_small, infeats), dtype=jnp.float32)
    y_small = jax.block_until_ready(fcnet_forward(x_small, params))
    assert y_small.shape == (B_small, outfeats)
    assert jnp.allclose(y_small, fcnet_reference_bf16(x_small, params),
                        atol=1e-4, rtol=1e-4), "mismatch vs bf16-accurate ref"
    assert jnp.allclose(y_small, fcnet_reference_f32(x_small, params),
                        atol=5e-2, rtol=5e-2), "mismatch vs f32 ref"

    # 2) Multi-block ragged batch (TB=128, grid=3, last block partially valid):
    #    exercises the pl.cdiv grid's read-padding / masked write-back path.
    key, kx2 = jax.random.split(key)
    B_mid = 300
    x_mid = jax.random.normal(kx2, (B_mid, infeats), dtype=jnp.float32)
    y_mid = jax.block_until_ready(fcnet_forward(x_mid, params, tile_b=128))
    assert y_mid.shape == (B_mid, outfeats)
    assert jnp.allclose(y_mid, fcnet_reference_bf16(x_mid, params),
                        atol=1e-4, rtol=1e-4), "mismatch vs bf16 ref (ragged)"

    # 3) Default tile path (TB auto-halved so v7x megacore still gets 2 blocks).
    key, kx3 = jax.random.split(key)
    B_big = 2500
    x_big = jax.random.normal(kx3, (B_big, infeats), dtype=jnp.float32)
    y_big = jax.block_until_ready(fcnet_forward(x_big, params))
    assert y_big.shape == (B_big, outfeats)
    assert jnp.allclose(y_big, fcnet_reference_bf16(x_big, params),
                        atol=1e-4, rtol=1e-4), "mismatch vs bf16 ref (big)"

    print("KERNEL_OK")
</pallas_src>

<mosaic_0001>
module attributes {stable_mosaic.version = 11 : i64} {
  func.func @fcnet_kernel(%arg0: i32, %arg1: memref<8x10xf32, #tpu.memory_space<vmem>>, %arg2: memref<4x16x128xbf16, #tpu.memory_space<vmem>>, %arg3: memref<4x1x128xf32, #tpu.memory_space<vmem>>, %arg4: memref<8x10xf32, #tpu.memory_space<vmem>>, %arg5: memref<8x16xbf16, #tpu.memory_space<vmem>>) attributes {dimension_semantics = [#tpu.dimension_semantics<parallel>], iteration_bounds = array<i64: 1>, scalar_prefetch = 0 : i64, scratch_operands = 1 : i64, tpu.core_type = #tpu.core_type<tc>, window_params = [{transform_indices = @transform_0, window_bounds = array<i64: 8, 10>}, {pipeline_mode = #tpu.pipeline_mode<synchronous>, transform_indices = @transform_1, window_bounds = array<i64: 4, 16, 128>}, {pipeline_mode = #tpu.pipeline_mode<synchronous>, transform_indices = @transform_2, window_bounds = array<i64: 4, 1, 128>}, {transform_indices = @transform_3, window_bounds = array<i64: 8, 10>}]} {
    %cst = arith.constant 0.000000e+00 : bf16
    %0 = vector.broadcast %cst : bf16 to vector<8x16xbf16>
    %c0 = arith.constant 0 : index
    %c0_0 = arith.constant 0 : index
    %1 = vector.load %arg5[%c0, %c0_0] : memref<8x16xbf16, #tpu.memory_space<vmem>>, vector<8x16xbf16>
    tpu.vector_store %arg5[%c0, %c0_0], %0 {strides = array<i32>} : memref<8x16xbf16, #tpu.memory_space<vmem>>, vector<8x16xbf16>,
    %c0_1 = arith.constant 0 : index
    %c0_2 = arith.constant 0 : index
    %2 = vector.load %arg1[%c0_1, %c0_2] : memref<8x10xf32, #tpu.memory_space<vmem>>, vector<8x10xf32>
    %3 = arith.truncf %2 : vector<8x10xf32> to vector<8x10xbf16>
    %c0_3 = arith.constant 0 : index
    %c0_4 = arith.constant 0 : index
    %4 = vector.load %arg5[%c0_3, %c0_4] : memref<8x16xbf16, #tpu.memory_space<vmem>>, vector<8x10xbf16>
    tpu.vector_store %arg5[%c0_3, %c0_4], %3 {strides = array<i32>} : memref<8x16xbf16, #tpu.memory_space<vmem>>, vector<8x10xbf16>,
    %c0_5 = arith.constant 0 : index
    %c0_6 = arith.constant 0 : index
    %5 = vector.load %arg5[%c0_5, %c0_6] : memref<8x16xbf16, #tpu.memory_space<vmem>>, vector<8x16xbf16>
    %c0_7 = arith.constant 0 : index
    %c0_8 = arith.constant 0 : index
    %c0_9 = arith.constant 0 : index
    %6 = vector.load %arg2[%c0_7, %c0_8, %c0_9] : memref<4x16x128xbf16, #tpu.memory_space<vmem>>, vector<1x16x128xbf16>
    %7 = vector.shape_cast %6 : vector<1x16x128xbf16> to vector<16x128xbf16>
    %cst_10 = arith.constant dense<0.000000e+00> : vector<8x128xf32>
    %8 = tpu.matmul %5, %7, %cst_10 {dimension_numbers = #tpu.dot_dimension_numbers<[1], [0], [0], [1], [0, 0, 1, 1], [], []>} : vector<8x16xbf16>, vector<16x128xbf16>, vector<8x128xf32> -> vector<8x128xf32>
    %c0_11 = arith.constant 0 : index
    %c0_12 = arith.constant 0 : index
    %c0_13 = arith.constant 0 : index
    %9 = vector.load %arg3[%c0_11, %c0_12, %c0_13] : memref<4x1x128xf32, #tpu.memory_space<vmem>>, vector<1x1x128xf32>
    %10 = vector.shape_cast %9 : vector<1x1x128xf32> to vector<1x128xf32>
    %11 = vector.broadcast %10 : vector<1x128xf32> to vector<8x128xf32>
    %12 = arith.addf %8, %11 : vector<8x128xf32>
    %cst_14 = arith.constant 0.000000e+00 : f32
    %13 = vector.broadcast %cst_14 : f32 to vector<8x128xf32>
    %14 = arith.maximumf %12, %13 : vector<8x128xf32>
    %15 = vector.extract_strided_slice %14 {offsets = [0, 0], sizes = [8, 16], strides = [1, 1]} : vector<8x128xf32> to vector<8x16xf32>
    %16 = arith.truncf %15 : vector<8x16xf32> to vector<8x16xbf16>
    %c1 = arith.constant 1 : index
    %c0_15 = arith.constant 0 : index
    %c0_16 = arith.constant 0 : index
    %17 = vector.load %arg2[%c1, %c0_15, %c0_16] : memref<4x16x128xbf16, #tpu.memory_space<vmem>>, vector<1x16x128xbf16>
    %18 = vector.shape_cast %17 : vector<1x16x128xbf16> to vector<16x128xbf16>
    %cst_17 = arith.constant dense<0.000000e+00> : vector<8x128xf32>
    %19 = tpu.matmul %16, %18, %cst_17 {dimension_numbers = #tpu.dot_dimension_numbers<[1], [0], [0], [1], [0, 0, 1, 1], [], []>} : vector<8x16xbf16>, vector<16x128xbf16>, vector<8x128xf32> -> vector<8x128xf32>
    %c1_18 = arith.constant 1 : index
    %c0_19 = arith.constant 0 : index
    %c0_20 = arith.constant 0 : index
    %20 = vector.load %arg3[%c1_18, %c0_19, %c0_20] : memref<4x1x128xf32, #tpu.memory_space<vmem>>, vector<1x1x128xf32>
    %21 = vector.shape_cast %20 : vector<1x1x128xf32> to vector<1x128xf32>
    %22 = vector.broadcast %21 : vector<1x128xf32> to vector<8x128xf32>
    %23 = arith.addf %19, %22 : vector<8x128xf32>
    %cst_21 = arith.constant 0.000000e+00 : f32
    %24 = vector.broadcast %cst_21 : f32 to vector<8x128xf32>
    %25 = arith.maximumf %23, %24 : vector<8x128xf32>
    %26 = vector.extract_strided_slice %25 {offsets = [0, 0], sizes = [8, 16], strides = [1, 1]} : vector<8x128xf32> to vector<8x16xf32>
    %27 = arith.truncf %26 : vector<8x16xf32> to vector<8x16xbf16>
    %c2 = arith.constant 2 : index
    %c0_22 = arith.constant 0 : index
    %c0_23 = arith.constant 0 : index
    %28 = vector.load %arg2[%c2, %c0_22, %c0_23] : memref<4x16x128xbf16, #tpu.memory_space<vmem>>, vector<1x16x128xbf16>
    %29 = vector.shape_cast %28 : vector<1x16x128xbf16> to vector<16x128xbf16>
    %cst_24 = arith.constant dense<0.000000e+00> : vector<8x128xf32>
    %30 = tpu.matmul %27, %29, %cst_24 {dimension_numbers = #tpu.dot_dimension_numbers<[1], [0], [0], [1], [0, 0, 1, 1], [], []>} : vector<8x16xbf16>, vector<16x128xbf16>, vector<8x128xf32> -> vector<8x128xf32>
    %c2_25 = arith.constant 2 : index
    %c0_26 = arith.constant 0 : index
    %c0_27 = arith.constant 0 : index
    %31 = vector.load %arg3[%c2_25, %c0_26, %c0_27] : memref<4x1x128xf32, #tpu.memory_space<vmem>>, vector<1x1x128xf32>
    %32 = vector.shape_cast %31 : vector<1x1x128xf32> to vector<1x128xf32>
    %33 = vector.broadcast %32 : vector<1x128xf32> to vector<8x128xf32>
    %34 = arith.addf %30, %33 : vector<8x128xf32>
    %cst_28 = arith.constant 0.000000e+00 : f32
    %35 = vector.broadcast %cst_28 : f32 to vector<8x128xf32>
    %36 = arith.maximumf %34, %35 : vector<8x128xf32>
    %37 = vector.extract_strided_slice %36 {offsets = [0, 0], sizes = [8, 16], strides = [1, 1]} : vector<8x128xf32> to vector<8x16xf32>
    %38 = arith.truncf %37 : vector<8x16xf32> to vector<8x16xbf16>
    %c3 = arith.constant 3 : index
    %c0_29 = arith.constant 0 : index
    %c0_30 = arith.constant 0 : index
    %39 = vector.load %arg2[%c3, %c0_29, %c0_30] : memref<4x16x128xbf16, #tpu.memory_space<vmem>>, vector<1x16x128xbf16>
    %40 = vector.shape_cast %39 : vector<1x16x128xbf16> to vector<16x128xbf16>
    %cst_31 = arith.constant dense<0.000000e+00> : vector<8x128xf32>
    %41 = tpu.matmul %38, %40, %cst_31 {dimension_numbers = #tpu.dot_dimension_numbers<[1], [0], [0], [1], [0, 0, 1, 1], [], []>} : vector<8x16xbf16>, vector<16x128xbf16>, vector<8x128xf32> -> vector<8x128xf32>
    %c3_32 = arith.constant 3 : index
    %c0_33 = arith.constant 0 : index
    %c0_34 = arith.constant 0 : index
    %42 = vector.load %arg3[%c3_32, %c0_33, %c0_34] : memref<4x1x128xf32, #tpu.memory_space<vmem>>, vector<1x1x128xf32>
    %43 = vector.shape_cast %42 : vector<1x1x128xf32> to vector<1x128xf32>
    %44 = vector.broadcast %43 : vector<1x128xf32> to vector<8x128xf32>
    %45 = arith.addf %41, %44 : vector<8x128xf32>
    %46 = vector.extract_strided_slice %45 {offsets = [0, 0], sizes = [8, 10], strides = [1, 1]} : vector<8x128xf32> to vector<8x10xf32>
    %c0_35 = arith.constant 0 : index
    %c0_36 = arith.constant 0 : index
    %47 = vector.load %arg4[%c0_35, %c0_36] : memref<8x10xf32, #tpu.memory_space<vmem>>, vector<8x10xf32>
    tpu.vector_store %arg4[%c0_35, %c0_36], %46 {strides = array<i32>} : memref<8x10xf32, #tpu.memory_space<vmem>>, vector<8x10xf32>,
    return
  }
  func.func @transform_0(%arg0: i32) -> (i32, i32) {
    %c0_i32 = arith.constant 0 : i32
    %c0_i32_0 = arith.constant 0 : i32
    return %arg0, %c0_i32 : i32, i32
  }
  func.func @transform_1(%arg0: i32) -> (i32, i32, i32) {
    %c0_i32 = arith.constant 0 : i32
    %c0_i32_0 = arith.constant 0 : i32
    %c0_i32_1 = arith.constant 0 : i32
    %c0_i32_2 = arith.constant 0 : i32
    return %c0_i32, %c0_i32_0, %c0_i32_1 : i32, i32, i32
  }
  func.func @transform_2(%arg0: i32) -> (i32, i32, i32) {
    %c0_i32 = arith.constant 0 : i32
    %c0_i32_0 = arith.constant 0 : i32
    %c0_i32_1 = arith.constant 0 : i32
    %c0_i32_2 = arith.constant 0 : i32
    return %c0_i32, %c0_i32_0, %c0_i32_1 : i32, i32, i32
  }
  func.func @transform_3(%arg0: i32) -> (i32, i32) {
    %c0_i32 = arith.constant 0 : i32
    %c0_i32_0 = arith.constant 0 : i32
    return %arg0, %c0_i32 : i32, i32
  }
}

</mosaic_0001>

<llo_original>
// kernel: tpu_custom_call.1
$region0: #{tpu_custom_call.1}
  #allocation0 [shape = 'u32[]', space=smem, size = 0x4, offset = 0x4, fixed_abs, tag = 'smem constant byte address 0x4 - core index']
  #allocation1 [shape = 'u32[144,128]{1,0:T(1,128)}', space=vmem, size = 0x12000, scoped, tag = 'internal scratch']
  #allocation2 [shape = 'bf16[8,16]{1,0:T(8,128)(2,1)}', space=vmem, size = 0x800, scoped, tag = 'scratch operand']
  %s0 = inlined_call_operand.hbm [shape: f32[8,10], index: 0, kind: input, shape index: {}]
  %s1 = inlined_call_operand.hbm [shape: bf16[4,16,128], index: 1, kind: input, shape index: {}]
  %s2 = inlined_call_operand.hbm [shape: f32[4,1,128], index: 2, kind: input, shape index: {}]
  %s3 = inlined_call_operand.hbm [shape: f32[8,10], index: 3, kind: output, shape index: {}]
  %s4 = sld [smem:[#allocation0]]
  $region34: #{tpu_custom_call.1} parent=0
    _
  %s6 = ssub.s32 1, %s4
  %s7 = scalar_select 0, %s6, %s4
  $region1: #{tpu_custom_call.1} parent=0
    #allocation3 [shape = 'u8[4096]{0}', space=vmem, size = 0x1000, scoped, tag = 'input window, operand 0, single buffered']
    #allocation4 [shape = 's32[1]{0}', space=sflag, size = 0x4, scoped, tag = 'scoped memory for tpu_custom_call.1']
    #allocation5 [shape = 's32[1]{0}', space=sflag, size = 0x4, scoped, tag = 'scoped memory for tpu_custom_call.1']
    #allocation6 [shape = 'u8[16384]{0}', space=vmem, size = 0x4000, scoped, tag = 'input window, operand 1, single buffered']
    #allocation7 [shape = 's32[1]{0}', space=sflag, size = 0x4, scoped, tag = 'scoped memory for tpu_custom_call.1']
    #allocation8 [shape = 'u8[2048]{0}', space=vmem, size = 0x800, scoped, tag = 'input window, operand 2, single buffered']
    #allocation9 [shape = 'u8[4096]{0}', space=vmem, size = 0x1000, scoped, tag = 'output window, operand 0, single buffered']
    %8 = vsyncpa [#allocation4], 0
    %9 = vsyncpa [#allocation7], 0
    %10 = vsyncpa [#allocation5], 0
    // Predicated region
    $region2: #{tpu_custom_call.1} parent=1 // pred_check
      _
    $region3: #{tpu_custom_call.1} parent=1 // pred_check_branch
      %12 = sbr.rel (0) target = $region5
    $region4: #{tpu_custom_call.1} parent=1 // pred_region
      %s14 = ssub.s32 128, 128
      %15 = vsyncadd [#allocation4], %s14
      %s17 = sshll.u32 [#allocation3], 4
      %s18 = int_to_ptr.vmem [resolvable:$true] %s17
      %20 = dma.hbm_to_vmem [thread:$0]  %s0, 128, %s18, [#allocation4]
    $region5: #{tpu_custom_call.1} parent=1 // pred_fallthru
      _
    // Predicated region
    $region6: #{tpu_custom_call.1} parent=1 // pred_check
      _
    $region7: #{tpu_custom_call.1} parent=1 // pred_check_branch
      %22 = sbr.rel (0) target = $region9
    $region8: #{tpu_custom_call.1} parent=1 // pred_region
      %s24 = ssub.s32 512, 512
      %25 = vsyncadd [#allocation7], %s24
      %s26 = sshll.u32 [#allocation6], 4
      %s27 = int_to_ptr.vmem [resolvable:$true] %s26
      %32 = dma.hbm_to_vmem [thread:$0]  %s1, 512, %s27, [#allocation7], 64, 64, 4
    $region9: #{tpu_custom_call.1} parent=1 // pred_fallthru
      _
    // Predicated region
    $region10: #{tpu_custom_call.1} parent=1 // pred_check
      _
    $region11: #{tpu_custom_call.1} parent=1 // pred_check_branch
      %34 = sbr.rel (0) target = $region13
    $region12: #{tpu_custom_call.1} parent=1 // pred_region
      %s36 = ssub.s32 64, 64
      %37 = vsyncadd [#allocation7], %s36
      %s38 = sshll.u32 [#allocation8], 4
      %s39 = int_to_ptr.vmem [resolvable:$true] %s38
      %44 = dma.hbm_to_vmem [thread:$0]  %s2, 64, %s39, [#allocation7], 16, 16, 1
    $region13: #{tpu_custom_call.1} parent=1 // pred_fallthru
      _
    // Predicated region
    $region14: #{tpu_custom_call.1} parent=1 // pred_check
      _
    $region15: #{tpu_custom_call.1} parent=1 // pred_check_branch
      %46 = sbr.rel (0) target = $region17
    $region16: #{tpu_custom_call.1} parent=1 // pred_region
      %47 = dma.done [#allocation4], 128
    $region17: #{tpu_custom_call.1} parent=1 // pred_fallthru
      _
    // Predicated region
    $region18: #{tpu_custom_call.1} parent=1 // pred_check
      _
    $region19: #{tpu_custom_call.1} parent=1 // pred_check_branch
      %49 = sbr.rel (0) target = $region21
    $region20: #{tpu_custom_call.1} parent=1 // pred_region
      %50 = dma.done [#allocation7], 512
    $region21: #{tpu_custom_call.1} parent=1 // pred_fallthru
      _
    // Predicated region
    $region22: #{tpu_custom_call.1} parent=1 // pred_check
      _
    $region23: #{tpu_custom_call.1} parent=1 // pred_check_branch
      %52 = sbr.rel (0) target = $region25
    $region24: #{tpu_custom_call.1} parent=1 // pred_region
      %53 = dma.done [#allocation7], 64
    $region25: #{tpu_custom_call.1} parent=1 // pred_fallthru
      _
    %vm55 = vcmask 125952
    %56 = vst.msk [vmem:[#allocation2] sm:$0xf] %vm55, 0
    %v57 = vld [vmem:[#allocation3] sm:$0xff]
    %v58 = vpack.c.bf16 %v57, %v57
    %vm59 = vcmask 76800
    %60 = vst.msk [vmem:[#allocation2] sm:$0xf] %vm59, %v58
    %v61 = vld [vmem:[#allocation2] sm:$0xf]
    %v62 = vld [vmem:[#allocation6] sm:$0xf]
    %v63 = vld [vmem:[#allocation6 + $0x4] sm:$0xf]
    %v64 = vld [vmem:[#allocation8] sm:$0x1]
    %v66 = vlaneseq
    %v67 = vshrl.u32 %v66, 7
    %v68 = vsub.s32 0, %v67
    %v69 = vrot.slane %v64, %v68
    %v73 = vunpack.c.l.b16 %v62
    %v74 = vunpack.c.l.b16 %v63
    %v75 = vpack.c.b16 %v74, %v73
    %vm77 = vcmask 130048
    %v79 = vsel %vm77, %v61, 0
    %81 = vmatprep.subr.bf16.mxu0 0
    %82 = vmatpush1.bf16.msra.mxu0 0
    %83 = vmatprep.subr.bf16.mxu0 0
    %84 = vmatpush1.bf16.msra.mxu0 0
    %85 = vmatprep.subr.bf16.mxu0 0
    %86 = vmatpush1.bf16.msra.mxu0 0
    %87 = vmatprep.subr.bf16.mxu0 0
    %88 = vmatpush1.bf16.msra.mxu0 0
    %89 = vmatprep.subr.bf16.mxu0 0
    %90 = vmatpush1.bf16.msra.mxu0 0
    %91 = vmatprep.subr.bf16.mxu0 0
    %92 = vmatpush1.bf16.msra.mxu0 0
    %93 = vmatprep.subr.bf16.mxu0 0
    %94 = vmatpush1.bf16.msra.mxu0 0
    %95 = vmatprep.subr.bf16.mxu0 0
    %96 = vmatpush1.bf16.msra.mxu0 %v75
    %97 = vmatprep.subr.bf16.mxu0 0
    %98 = vmatpush2.bf16.msra.mxu0 0
    %99 = vmatprep.subr.bf16.mxu0 0
    %100 = vmatpush2.bf16.msra.mxu0 0
    %101 = vmatprep.subr.bf16.mxu0 0
    %102 = vmatpush2.bf16.msra.mxu0 0
    %103 = vmatprep.subr.bf16.mxu0 0
    %104 = vmatpush2.bf16.msra.mxu0 0
    %105 = vmatprep.subr.bf16.mxu0 0
    %106 = vmatpush2.bf16.msra.mxu0 0
    %107 = vmatprep.subr.bf16.mxu0 0
    %108 = vmatpush2.bf16.msra.mxu0 0
    %109 = vmatprep.subr.bf16.mxu0 0
    %110 = vmatpush2.bf16.msra.mxu0 0
    %111 = vmatprep.subr.bf16.mxu0 0
    %112 = vmatpush2.bf16.msra.mxu0 0
    %113 = vmatprep.mubr.bf16.mxu0 0
    %114 = vmatmul.mubr.bf16.gmra.mxu0 %v79
    %v115 = vpop.f32.mrf.mxu0
    %v116 = vadd.f32 %v69, %v115
    %v117 = vpop.f32.mrf.mxu0
    %v118 = vpop.f32.mrf.mxu0
    %v119 = vpop.f32.mrf.mxu0
    %120 = vdwg.mxu0
    %v121 = vmax.f32 %v116, 0.0
    %v122 = vpack.c.bf16 %v121, %v121
    %s123 = scalar_lea.vmem [#allocation6], 8
    %v124 = vld [vmem:[%s123] sm:$0xf]
    %v125 = vld [vmem:[%s123 + $0x4] sm:$0xf]
    %s126 = scalar_lea.vmem [#allocation8], 1
    %v127 = vld [vmem:[%s126] sm:$0x1]
    %v129 = vlaneseq
    %v130 = vshrl.u32 %v129, 7
    %v131 = vsub.s32 0, %v130
    %v132 = vrot.slane %v127, %v131
    %v136 = vunpack.c.l.b16 %v124
    %v137 = vunpack.c.l.b16 %v125
    %v138 = vpack.c.b16 %v137, %v136
    %v141 = vsel %vm77, %v122, 0
    %143 = vmatprep.subr.bf16.mxu0 0
    %144 = vmatpush1.bf16.msra.mxu0 0
    %145 = vmatprep.subr.bf16.mxu0 0
    %146 = vmatpush1.bf16.msra.mxu0 0
    %147 = vmatprep.subr.bf16.mxu0 0
    %148 = vmatpush1.bf16.msra.mxu0 0
    %149 = vmatprep.subr.bf16.mxu0 0
    %150 = vmatpush1.bf16.msra.mxu0 0
    %151 = vmatprep.subr.bf16.mxu0 0
    %152 = vmatpush1.bf16.msra.mxu0 0
    %153 = vmatprep.subr.bf16.mxu0 0
    %154 = vmatpush1.bf16.msra.mxu0 0
    %155 = vmatprep.subr.bf16.mxu0 0
    %156 = vmatpush1.bf16.msra.mxu0 0
    %157 = vmatprep.subr.bf16.mxu0 0
    %158 = vmatpush1.bf16.msra.mxu0 %v138
    %159 = vmatprep.subr.bf16.mxu0 0
    %160 = vmatpush2.bf16.msra.mxu0 0
    %161 = vmatprep.subr.bf16.mxu0 0
    %162 = vmatpush2.bf16.msra.mxu0 0
    %163 = vmatprep.subr.bf16.mxu0 0
    %164 = vmatpush2.bf16.msra.mxu0 0
    %165 = vmatprep.subr.bf16.mxu0 0
    %166 = vmatpush2.bf16.msra.mxu0 0
    %167 = vmatprep.subr.bf16.mxu0 0
    %168 = vmatpush2.bf16.msra.mxu0 0
    %169 = vmatprep.subr.bf16.mxu0 0
    %170 = vmatpush2.bf16.msra.mxu0 0
    %171 = vmatprep.subr.bf16.mxu0 0
    %172 = vmatpush2.bf16.msra.mxu0 0
    %173 = vmatprep.subr.bf16.mxu0 0
    %174 = vmatpush2.bf16.msra.mxu0 0
    %175 = vmatprep.mubr.bf16.mxu0 0
    %176 = vmatmul.mubr.bf16.gmra.mxu0 %v141
    %v177 = vpop.f32.mrf.mxu0
    %v178 = vadd.f32 %v132, %v177
    %v179 = vpop.f32.mrf.mxu0
    %v180 = vpop.f32.mrf.mxu0
    %v181 = vpop.f32.mrf.mxu0
    %182 = vdwg.mxu0
    %v183 = vmax.f32 %v178, 0.0
    %v184 = vpack.c.bf16 %v183, %v183
    %s185 = scalar_lea.vmem [#allocation6], 16
    %v186 = vld [vmem:[%s185] sm:$0xf]
    %v187 = vld [vmem:[%s185 + $0x4] sm:$0xf]
    %s188 = scalar_lea.vmem [#allocation8], 2
    %v189 = vld [vmem:[%s188] sm:$0x1]
    %v191 = vlaneseq
    %v192 = vshrl.u32 %v191, 7
    %v193 = vsub.s32 0, %v192
    %v194 = vrot.slane %v189, %v193
    %v198 = vunpack.c.l.b16 %v186
    %v199 = vunpack.c.l.b16 %v187
    %v200 = vpack.c.b16 %v199, %v198
    %v203 = vsel %vm77, %v184, 0
    %205 = vmatprep.subr.bf16.mxu0 0
    %206 = vmatpush1.bf16.msra.mxu0 0
    %207 = vmatprep.subr.bf16.mxu0 0
    %208 = vmatpush1.bf16.msra.mxu0 0
    %209 = vmatprep.subr.bf16.mxu0 0
    %210 = vmatpush1.bf16.msra.mxu0 0
    %211 = vmatprep.subr.bf16.mxu0 0
    %212 = vmatpush1.bf16.msra.mxu0 0
    %213 = vmatprep.subr.bf16.mxu0 0
    %214 = vmatpush1.bf16.msra.mxu0 0
    %215 = vmatprep.subr.bf16.mxu0 0
    %216 = vmatpush1.bf16.msra.mxu0 0
    %217 = vmatprep.subr.bf16.mxu0 0
    %218 = vmatpush1.bf16.msra.mxu0 0
    %219 = vmatprep.subr.bf16.mxu0 0
    %220 = vmatpush1.bf16.msra.mxu0 %v200
    %221 = vmatprep.subr.bf16.mxu0 0
    %222 = vmatpush2.bf16.msra.mxu0 0
    %223 = vmatprep.subr.bf16.mxu0 0
    %224 = vmatpush2.bf16.msra.mxu0 0
    %225 = vmatprep.subr.bf16.mxu0 0
    %226 = vmatpush2.bf16.msra.mxu0 0
    %227 = vmatprep.subr.bf16.mxu0 0
    %228 = vmatpush2.bf16.msra.mxu0 0
    %229 = vmatprep.subr.bf16.mxu0 0
    %230 = vmatpush2.bf16.msra.mxu0 0
    %231 = vmatprep.subr.bf16.mxu0 0
    %232 = vmatpush2.bf16.msra.mxu0 0
    %233 = vmatprep.subr.bf16.mxu0 0
    %234 = vmatpush2.bf16.msra.mxu0 0
    %235 = vmatprep.subr.bf16.mxu0 0
    %236 = vmatpush2.bf16.msra.mxu0 0
    %237 = vmatprep.mubr.bf16.mxu0 0
    %238 = vmatmul.mubr.bf16.gmra.mxu0 %v203
    %v239 = vpop.f32.mrf.mxu0
    %v240 = vadd.f32 %v194, %v239
    %v241 = vpop.f32.mrf.mxu0
    %v242 = vpop.f32.mrf.mxu0
    %v243 = vpop.f32.mrf.mxu0
    %244 = vdwg.mxu0
    %v245 = vmax.f32 %v240, 0.0
    %v246 = vpack.c.bf16 %v245, %v245
    %s247 = scalar_lea.vmem [#allocation6], 24
    %v248 = vld [vmem:[%s247] sm:$0xf]
    %v249 = vld [vmem:[%s247 + $0x4] sm:$0xf]
    %s250 = scalar_lea.vmem [#allocation8], 3
    %v251 = vld [vmem:[%s250] sm:$0x1]
    %v253 = vlaneseq
    %v254 = vshrl.u32 %v253, 7
    %v255 = vsub.s32 0, %v254
    %v256 = vrot.slane %v251, %v255
    %v260 = vunpack.c.l.b16 %v248
    %v261 = vunpack.c.l.b16 %v249
    %v262 = vpack.c.b16 %v261, %v260
    %v265 = vsel %vm77, %v246, 0
    %267 = vmatprep.subr.bf16.mxu0 0
    %268 = vmatpush1.bf16.msra.mxu0 0
    %269 = vmatprep.subr.bf16.mxu0 0
    %270 = vmatpush1.bf16.msra.mxu0 0
    %271 = vmatprep.subr.bf16.mxu0 0
    %272 = vmatpush1.bf16.msra.mxu0 0
    %273 = vmatprep.subr.bf16.mxu0 0
    %274 = vmatpush1.bf16.msra.mxu0 0
    %275 = vmatprep.subr.bf16.mxu0 0
    %276 = vmatpush1.bf16.msra.mxu0 0
    %277 = vmatprep.subr.bf16.mxu0 0
    %278 = vmatpush1.bf16.msra.mxu0 0
    %279 = vmatprep.subr.bf16.mxu0 0
    %280 = vmatpush1.bf16.msra.mxu0 0
    %281 = vmatprep.subr.bf16.mxu0 0
    %282 = vmatpush1.bf16.msra.mxu0 %v262
    %283 = vmatprep.subr.bf16.mxu0 0
    %284 = vmatpush2.bf16.msra.mxu0 0
    %285 = vmatprep.subr.bf16.mxu0 0
    %286 = vmatpush2.bf16.msra.mxu0 0
    %287 = vmatprep.subr.bf16.mxu0 0
    %288 = vmatpush2.bf16.msra.mxu0 0
    %289 = vmatprep.subr.bf16.mxu0 0
    %290 = vmatpush2.bf16.msra.mxu0 0
    %291 = vmatprep.subr.bf16.mxu0 0
    %292 = vmatpush2.bf16.msra.mxu0 0
    %293 = vmatprep.subr.bf16.mxu0 0
    %294 = vmatpush2.bf16.msra.mxu0 0
    %295 = vmatprep.subr.bf16.mxu0 0
    %296 = vmatpush2.bf16.msra.mxu0 0
    %297 = vmatprep.subr.bf16.mxu0 0
    %298 = vmatpush2.bf16.msra.mxu0 0
    %299 = vmatprep.mubr.bf16.mxu0 0
    %300 = vmatmul.mubr.bf16.gmra.mxu0 %v265
    %v301 = vpop.f32.mrf.mxu0
    %v302 = vadd.f32 %v256, %v301
    %v303 = vpop.f32.mrf.mxu0
    %v304 = vpop.f32.mrf.mxu0
    %v305 = vpop.f32.mrf.mxu0
    %306 = vdwg.mxu0
    %vm307 = vcmask 80896
    %308 = vst.msk [vmem:[#allocation9] sm:$0xff] %vm307, %v302
    // Predicated region
    $region26: #{tpu_custom_call.1} parent=1 // pred_check
      _
    $region27: #{tpu_custom_call.1} parent=1 // pred_check_branch
      %310 = sbr.rel (0) target = $region29
    $region28: #{tpu_custom_call.1} parent=1 // pred_region
      %s312 = ssub.s32 128, 128
      %313 = vsyncadd [#allocation5], %s312
      %s315 = sshll.u32 [#allocation9], 4
      %s316 = int_to_ptr.vmem [resolvable:$true] %s315
      %318 = dma.vmem_to_hbm [thread:$0]  %s316, 128, %s3, [#allocation5]
    $region29: #{tpu_custom_call.1} parent=1 // pred_fallthru
      _
    // Predicated region
    $region30: #{tpu_custom_call.1} parent=1 // pred_check
      _
    $region31: #{tpu_custom_call.1} parent=1 // pred_check_branch
      %320 = sbr.rel (0) target = $region33
    $region32: #{tpu_custom_call.1} parent=1 // pred_region
      %321 = dma.done [#allocation5], 128
    $region33: #{tpu_custom_call.1} parent=1 // pred_fallthru
      _
    %322 = vsyncpa [#allocation4], 1
    %323 = vsyncpa [#allocation7], 1
    %324 = vsyncpa [#allocation5], 1

</llo_original>
